<compile_context>
chip_gen: v5e
topology: v5e:2x2
jax: 0.10.0
libtpu: 0.0.40
codegen_flags: <defaults>
</compile_context>

<pallas_src>
import functools

import jax
import jax.numpy as jnp
from jax.experimental import pallas as pl
from jax.experimental.pallas import tpu as pltpu

HID = 100     # hidden width implied by linear1/linear2 (in=200, out=100), dim_emb=100
HP = 128      # lane-padded hidden / embedding width
BPAD = 8      # batch padded to sublane width


def _rnn_kernel(tok_ref,                      # (seq*BPAD, 1) int32  VMEM
                xtab_ref,                     # (VP, 128) f32: emb @ W1x + b1 (padded)
                embT_ref,                     # (128, VP) f32: padded emb^T (for logits)
                wrec_ref,                     # (384, 128) f32: [W1h; W2h1; W2h]
                b2_ref,                       # (1, 128) f32
                out_ref,                      # (seq*BPAD, VP) f32
                h2_scr,                       # VMEM scratch (seq*BPAD, 128) f32
                *, seq, num_tokens):
    rows = seq * BPAD
    VP = xtab_ref.shape[0]

    # ---- 1) One-hot matmul gather of precomputed layer-1 input projections. ----
    vocab_ids = jax.lax.broadcasted_iota(jnp.int32, (rows, VP), 1)
    onehot = (vocab_ids == tok_ref[...]).astype(jnp.float32)          # (rows, VP)
    xproj_all = jnp.dot(onehot, xtab_ref[...],
                        preferred_element_type=jnp.float32)           # (rows, 128)

    # ---- 2) Recurrence: one 128-K dot + one fused 256-K dot per step. ----
    w1h = wrec_ref[pl.ds(0, HP), :]                                   # (128, 128)
    w2 = wrec_ref[pl.ds(HP, 2 * HP), :]                               # (256, 128)
    b2 = jnp.broadcast_to(b2_ref[...], (BPAD, HP))                    # hoisted broadcast

    h1 = jnp.zeros((BPAD, HP), jnp.float32)
    h2 = jnp.zeros((BPAD, HP), jnp.float32)
    for col in range(seq):                                            # seq is tiny: unroll
        xp = xproj_all[col * BPAD:(col + 1) * BPAD, :]                # aligned 8-row slice
        h1 = jnp.tanh(xp + jnp.dot(h1, w1h, preferred_element_type=jnp.float32))
        h12 = jnp.concatenate([h1, h2], axis=-1)                      # (BPAD, 256)
        h2 = jnp.tanh(jnp.dot(h12, w2, preferred_element_type=jnp.float32) + b2)
        h2_scr[pl.ds(col * BPAD, BPAD), :] = h2                       # aligned 8-row store

    # ---- 3) One output projection + masked log_softmax, lane-dense store. ----
    logits = jnp.dot(h2_scr[...], embT_ref[...], preferred_element_type=jnp.float32)
    col_ids = jax.lax.broadcasted_iota(jnp.int32, logits.shape, 1)
    logits = jnp.where(col_ids < num_tokens, logits, jnp.float32(-1e30))
    m = jnp.max(logits, axis=-1, keepdims=True)
    lse = jnp.log(jnp.sum(jnp.exp(logits - m), axis=-1, keepdims=True)) + m
    out_ref[...] = logits - lse


def pack_params(emb, w1, b1, w2, b2):
    """One-time repacking into kernel-ready, 128-lane-padded arrays (call once)."""
    num_tokens, dim_emb = emb.shape
    VP = ((num_tokens + 127) // 128) * 128
    f32 = jnp.float32
    emb = emb.astype(f32)
    w1x = w1[:, :dim_emb].T.astype(f32)      # (dim_emb, HID)
    w1h = w1[:, dim_emb:].T.astype(f32)      # (HID, HID)
    w2h1 = w2[:, :HID].T.astype(f32)
    w2h = w2[:, HID:].T.astype(f32)

    # Per-token layer-1 input projection with b1 folded in (padded lanes stay zero).
    xtab = jnp.zeros((VP, HP), f32).at[:num_tokens, :HID].set(
        emb @ w1x + b1.astype(f32)[None, :])
    # Recurrent weights packed contiguously: [W1h; W2h1; W2h] -> one DMA.
    w1h_p = jnp.zeros((HP, HP), f32).at[:HID, :HID].set(w1h)
    w2h1_p = jnp.zeros((HP, HP), f32).at[:HID, :HID].set(w2h1)
    w2h_p = jnp.zeros((HP, HP), f32).at[:HID, :HID].set(w2h)
    wrec = jnp.concatenate([w1h_p, w2h1_p, w2h_p], axis=0)            # (384, 128)
    b2p = jnp.zeros((1, HP), f32).at[0, :HID].set(b2.astype(f32))
    embT = jnp.zeros((HP, VP), f32).at[:dim_emb, :num_tokens].set(emb.T)
    return xtab, embT, wrec, b2p


@functools.partial(jax.jit, static_argnames=("num_tokens",))
def rnn_forward(tokens, xtab, embT, wrec, b2p, *, num_tokens):
    """tokens: (batch, seq) int32. Packed params from pack_params. Returns
    (seq*batch, num_tokens) log-probs in torch.vstack row order (col*batch + b)."""
    batch, seq = tokens.shape
    VP = xtab.shape[0]
    rows = seq * BPAD

    # Pad batch to 8 sublanes; padded rows use token 0 and are sliced off afterwards.
    tok_pad = jnp.zeros((seq, BPAD), jnp.int32).at[:, :batch].set(
        tokens.T.astype(jnp.int32))
    tok_col = tok_pad.reshape(rows, 1)

    full = lambda shape: pl.BlockSpec(shape, lambda i: (0,) * len(shape))

    out_p = pl.pallas_call(
        functools.partial(_rnn_kernel, seq=seq, num_tokens=num_tokens),
        out_shape=jax.ShapeDtypeStruct((rows, VP), jnp.float32),
        grid_spec=pltpu.PrefetchScalarGridSpec(
            num_scalar_prefetch=0,
            grid=(1,),                          # whole recurrence in one invocation
            in_specs=[
                full((rows, 1)),                # tokens (for in-kernel one-hot gather)
                full((VP, HP)),                 # xtab = emb @ W1x + b1
                full((HP, VP)),                 # emb^T
                full((3 * HP, HP)),             # packed [W1h; W2h1; W2h]
                full((1, HP)),                  # b2
            ],
            out_specs=pl.BlockSpec((rows, VP), lambda i: (0, 0)),
            scratch_shapes=[pltpu.VMEM((rows, HP), jnp.float32)],
        ),
        compiler_params=pltpu.CompilerParams(
            dimension_semantics=("arbitrary",)),
    )(tok_col, xtab, embT, wrec, b2p)

    # Drop padded batch rows and padded vocab columns.
    out = out_p.reshape(seq, BPAD, VP)[:, :batch, :num_tokens]
    return out.reshape(seq * batch, num_tokens)


def _reference_forward(tokens, emb, w1, b1, w2, b2):
    """Pure-JAX reference mirroring the PyTorch forward (for validation)."""
    batch, seq = tokens.shape
    h1 = jnp.zeros((batch, 100), jnp.float32)
    h2 = jnp.zeros((batch, 100), jnp.float32)
    outs = []
    for col in range(seq):
        x = emb[tokens[:, col]]
        h1 = jnp.tanh(jnp.concatenate([x, h1], axis=1) @ w1.T + b1)
        h2 = jnp.tanh(jnp.concatenate([h1, h2], axis=1) @ w2.T + b2)
        outs.append(h2 @ emb.T)
    logits = jnp.concatenate(outs, axis=0)
    return jax.nn.log_softmax(logits, axis=1)


if __name__ == "__main__":
    # Module hyperparameters: dim_emb must be 100 (linear1 in-features = 200 = dim_emb + 100)
    num_tokens = 64
    dim_emb = 100
    batch = 2
    seq = 8

    key = jax.random.PRNGKey(0)
    k_emb, k_w1, k_b1, k_w2, k_b2, k_tok = jax.random.split(key, 6)

    # nn.Embedding default: N(0, 1)
    emb = jax.random.normal(k_emb, (num_tokens, dim_emb), jnp.float32)
    # init_weights: uniform(-0.1, 0.1) for linear weights; biases small uniform
    w1 = jax.random.uniform(k_w1, (100, 200), jnp.float32, -0.1, 0.1)
    b1 = jax.random.uniform(k_b1, (100,), jnp.float32, -0.05, 0.05)
    w2 = jax.random.uniform(k_w2, (100, 200), jnp.float32, -0.1, 0.1)
    b2 = jax.random.uniform(k_b2, (100,), jnp.float32, -0.05, 0.05)

    tokens = jax.random.randint(k_tok, (batch, seq), 0, num_tokens, jnp.int32)

    # One-time weight repacking (not on the per-call path).
    xtab, embT, wrec, b2p = pack_params(emb, w1, b1, w2, b2)
    xtab, embT, wrec, b2p = jax.block_until_ready((xtab, embT, wrec, b2p))

    out = rnn_forward(tokens, xtab, embT, wrec, b2p, num_tokens=num_tokens)
    out = jax.block_until_ready(out)

    ref = _reference_forward(tokens, emb, w1, b1, w2, b2)
    assert out.shape == (seq * batch, num_tokens), out.shape
    assert jnp.allclose(out, ref, atol=1e-4, rtol=1e-4), float(jnp.max(jnp.abs(out - ref)))

    print("KERNEL_OK")
</pallas_src>

<mosaic_0001>
module attributes {stable_mosaic.version = 11 : i64} {
  func.func @_rnn_kernel(%arg0: i32, %arg1: memref<64x1xi32, #tpu.memory_space<vmem>>, %arg2: memref<128x128xf32, #tpu.memory_space<vmem>>, %arg3: memref<128x128xf32, #tpu.memory_space<vmem>>, %arg4: memref<384x128xf32, #tpu.memory_space<vmem>>, %arg5: memref<1x128xf32, #tpu.memory_space<vmem>>, %arg6: memref<64x128xf32, #tpu.memory_space<vmem>>, %arg7: memref<64x128xf32, #tpu.memory_space<vmem>>) attributes {dimension_semantics = [#tpu.dimension_semantics<arbitrary>], iteration_bounds = array<i64: 1>, scalar_prefetch = 0 : i64, scratch_operands = 1 : i64, tpu.core_type = #tpu.core_type<tc>, window_params = [{pipeline_mode = #tpu.pipeline_mode<synchronous>, transform_indices = @transform_0, window_bounds = array<i64: 64, 1>}, {pipeline_mode = #tpu.pipeline_mode<synchronous>, transform_indices = @transform_1, window_bounds = array<i64: 128, 128>}, {pipeline_mode = #tpu.pipeline_mode<synchronous>, transform_indices = @transform_2, window_bounds = array<i64: 128, 128>}, {pipeline_mode = #tpu.pipeline_mode<synchronous>, transform_indices = @transform_3, window_bounds = array<i64: 384, 128>}, {pipeline_mode = #tpu.pipeline_mode<synchronous>, transform_indices = @transform_4, window_bounds = array<i64: 1, 128>}, {pipeline_mode = #tpu.pipeline_mode<synchronous>, transform_indices = @transform_5, window_bounds = array<i64: 64, 128>}]} {
    %0 = tpu.iota {dimensions = array<i32: 1>} : vector<64x128xi32>
    %c0 = arith.constant 0 : index
    %c0_0 = arith.constant 0 : index
    %1 = vector.load %arg1[%c0, %c0_0] : memref<64x1xi32, #tpu.memory_space<vmem>>, vector<64x1xi32>
    %2 = vector.broadcast %1 : vector<64x1xi32> to vector<64x128xi32>
    %3 = arith.cmpi eq, %0, %2 : vector<64x128xi32>
    %4 = arith.extui %3 : vector<64x128xi1> to vector<64x128xi32>
    %5 = arith.sitofp %4 : vector<64x128xi32> to vector<64x128xf32>
    %c0_1 = arith.constant 0 : index
    %c0_2 = arith.constant 0 : index
    %6 = vector.load %arg2[%c0_1, %c0_2] : memref<128x128xf32, #tpu.memory_space<vmem>>, vector<128x128xf32>
    %cst = arith.constant dense<0.000000e+00> : vector<64x128xf32>
    %7 = tpu.matmul %5, %6, %cst {dimension_numbers = #tpu.dot_dimension_numbers<[1], [0], [0], [1], [0, 0, 1, 1], [], []>} : vector<64x128xf32>, vector<128x128xf32>, vector<64x128xf32> -> vector<64x128xf32>
    %c0_3 = arith.constant 0 : index
    %c0_4 = arith.constant 0 : index
    %8 = vector.load %arg4[%c0_3, %c0_4] : memref<384x128xf32, #tpu.memory_space<vmem>>, vector<128x128xf32>
    %c128 = arith.constant 128 : index
    %c0_5 = arith.constant 0 : index
    %9 = vector.load %arg4[%c128, %c0_5] : memref<384x128xf32, #tpu.memory_space<vmem>>, vector<256x128xf32>
    %c0_6 = arith.constant 0 : index
    %c0_7 = arith.constant 0 : index
    %10 = vector.load %arg5[%c0_6, %c0_7] : memref<1x128xf32, #tpu.memory_space<vmem>>, vector<1x128xf32>
    %11 = vector.shape_cast %10 : vector<1x128xf32> to vector<1x128xf32>
    %12 = vector.broadcast %11 : vector<1x128xf32> to vector<8x128xf32>
    %cst_8 = arith.constant 0.000000e+00 : f32
    %13 = vector.broadcast %cst_8 : f32 to vector<8x128xf32>
    %cst_9 = arith.constant 0.000000e+00 : f32
    %14 = vector.broadcast %cst_9 : f32 to vector<8x128xf32>
    %15 = vector.extract_strided_slice %7 {offsets = [0, 0], sizes = [8, 128], strides = [1, 1]} : vector<64x128xf32> to vector<8x128xf32>
    %cst_10 = arith.constant dense<0.000000e+00> : vector<8x128xf32>
    %16 = tpu.matmul %13, %8, %cst_10 {dimension_numbers = #tpu.dot_dimension_numbers<[1], [0], [0], [1], [0, 0, 1, 1], [], []>} : vector<8x128xf32>, vector<128x128xf32>, vector<8x128xf32> -> vector<8x128xf32>
    %17 = arith.addf %15, %16 : vector<8x128xf32>
    %18 = math.tanh %17 : vector<8x128xf32>
    %19 = tpu.concatenate %18, %14 in 1 : vector<8x128xf32>, vector<8x128xf32> -> vector<8x256xf32>
    %cst_11 = arith.constant dense<0.000000e+00> : vector<8x128xf32>
    %20 = tpu.matmul %19, %9, %cst_11 {dimension_numbers = #tpu.dot_dimension_numbers<[1], [0], [0], [1], [0, 0, 1, 1], [], []>} : vector<8x256xf32>, vector<256x128xf32>, vector<8x128xf32> -> vector<8x128xf32>
    %21 = arith.addf %20, %12 : vector<8x128xf32>
    %22 = math.tanh %21 : vector<8x128xf32>
    %c0_12 = arith.constant 0 : index
    %c0_13 = arith.constant 0 : index
    %23 = vector.load %arg7[%c0_12, %c0_13] : memref<64x128xf32, #tpu.memory_space<vmem>>, vector<8x128xf32>
    tpu.vector_store %arg7[%c0_12, %c0_13], %22 {strides = array<i32>} : memref<64x128xf32, #tpu.memory_space<vmem>>, vector<8x128xf32>,
    %24 = vector.extract_strided_slice %7 {offsets = [8, 0], sizes = [8, 128], strides = [1, 1]} : vector<64x128xf32> to vector<8x128xf32>
    %cst_14 = arith.constant dense<0.000000e+00> : vector<8x128xf32>
    %25 = tpu.matmul %18, %8, %cst_14 {dimension_numbers = #tpu.dot_dimension_numbers<[1], [0], [0], [1], [0, 0, 1, 1], [], []>} : vector<8x128xf32>, vector<128x128xf32>, vector<8x128xf32> -> vector<8x128xf32>
    %26 = arith.addf %24, %25 : vector<8x128xf32>
    %27 = math.tanh %26 : vector<8x128xf32>
    %28 = tpu.concatenate %27, %22 in 1 : vector<8x128xf32>, vector<8x128xf32> -> vector<8x256xf32>
    %cst_15 = arith.constant dense<0.000000e+00> : vector<8x128xf32>
    %29 = tpu.matmul %28, %9, %cst_15 {dimension_numbers = #tpu.dot_dimension_numbers<[1], [0], [0], [1], [0, 0, 1, 1], [], []>} : vector<8x256xf32>, vector<256x128xf32>, vector<8x128xf32> -> vector<8x128xf32>
    %30 = arith.addf %29, %12 : vector<8x128xf32>
    %31 = math.tanh %30 : vector<8x128xf32>
    %c8 = arith.constant 8 : index
    %c0_16 = arith.constant 0 : index
    %32 = vector.load %arg7[%c8, %c0_16] : memref<64x128xf32, #tpu.memory_space<vmem>>, vector<8x128xf32>
    tpu.vector_store %arg7[%c8, %c0_16], %31 {strides = array<i32>} : memref<64x128xf32, #tpu.memory_space<vmem>>, vector<8x128xf32>,
    %33 = vector.extract_strided_slice %7 {offsets = [16, 0], sizes = [8, 128], strides = [1, 1]} : vector<64x128xf32> to vector<8x128xf32>
    %cst_17 = arith.constant dense<0.000000e+00> : vector<8x128xf32>
    %34 = tpu.matmul %27, %8, %cst_17 {dimension_numbers = #tpu.dot_dimension_numbers<[1], [0], [0], [1], [0, 0, 1, 1], [], []>} : vector<8x128xf32>, vector<128x128xf32>, vector<8x128xf32> -> vector<8x128xf32>
    %35 = arith.addf %33, %34 : vector<8x128xf32>
    %36 = math.tanh %35 : vector<8x128xf32>
    %37 = tpu.concatenate %36, %31 in 1 : vector<8x128xf32>, vector<8x128xf32> -> vector<8x256xf32>
    %cst_18 = arith.constant dense<0.000000e+00> : vector<8x128xf32>
    %38 = tpu.matmul %37, %9, %cst_18 {dimension_numbers = #tpu.dot_dimension_numbers<[1], [0], [0], [1], [0, 0, 1, 1], [], []>} : vector<8x256xf32>, vector<256x128xf32>, vector<8x128xf32> -> vector<8x128xf32>
    %39 = arith.addf %38, %12 : vector<8x128xf32>
    %40 = math.tanh %39 : vector<8x128xf32>
    %c16 = arith.constant 16 : index
    %c0_19 = arith.constant 0 : index
    %41 = vector.load %arg7[%c16, %c0_19] : memref<64x128xf32, #tpu.memory_space<vmem>>, vector<8x128xf32>
    tpu.vector_store %arg7[%c16, %c0_19], %40 {strides = array<i32>} : memref<64x128xf32, #tpu.memory_space<vmem>>, vector<8x128xf32>,
    %42 = vector.extract_strided_slice %7 {offsets = [24, 0], sizes = [8, 128], strides = [1, 1]} : vector<64x128xf32> to vector<8x128xf32>
    %cst_20 = arith.constant dense<0.000000e+00> : vector<8x128xf32>
    %43 = tpu.matmul %36, %8, %cst_20 {dimension_numbers = #tpu.dot_dimension_numbers<[1], [0], [0], [1], [0, 0, 1, 1], [], []>} : vector<8x128xf32>, vector<128x128xf32>, vector<8x128xf32> -> vector<8x128xf32>
    %44 = arith.addf %42, %43 : vector<8x128xf32>
    %45 = math.tanh %44 : vector<8x128xf32>
    %46 = tpu.concatenate %45, %40 in 1 : vector<8x128xf32>, vector<8x128xf32> -> vector<8x256xf32>
    %cst_21 = arith.constant dense<0.000000e+00> : vector<8x128xf32>
    %47 = tpu.matmul %46, %9, %cst_21 {dimension_numbers = #tpu.dot_dimension_numbers<[1], [0], [0], [1], [0, 0, 1, 1], [], []>} : vector<8x256xf32>, vector<256x128xf32>, vector<8x128xf32> -> vector<8x128xf32>
    %48 = arith.addf %47, %12 : vector<8x128xf32>
    %49 = math.tanh %48 : vector<8x128xf32>
    %c24 = arith.constant 24 : index
    %c0_22 = arith.constant 0 : index
    %50 = vector.load %arg7[%c24, %c0_22] : memref<64x128xf32, #tpu.memory_space<vmem>>, vector<8x128xf32>
    tpu.vector_store %arg7[%c24, %c0_22], %49 {strides = array<i32>} : memref<64x128xf32, #tpu.memory_space<vmem>>, vector<8x128xf32>,
    %51 = vector.extract_strided_slice %7 {offsets = [32, 0], sizes = [8, 128], strides = [1, 1]} : vector<64x128xf32> to vector<8x128xf32>
    %cst_23 = arith.constant dense<0.000000e+00> : vector<8x128xf32>
    %52 = tpu.matmul %45, %8, %cst_23 {dimension_numbers = #tpu.dot_dimension_numbers<[1], [0], [0], [1], [0, 0, 1, 1], [], []>} : vector<8x128xf32>, vector<128x128xf32>, vector<8x128xf32> -> vector<8x128xf32>
    %53 = arith.addf %51, %52 : vector<8x128xf32>
    %54 = math.tanh %53 : vector<8x128xf32>
    %55 = tpu.concatenate %54, %49 in 1 : vector<8x128xf32>, vector<8x128xf32> -> vector<8x256xf32>
    %cst_24 = arith.constant dense<0.000000e+00> : vector<8x128xf32>
    %56 = tpu.matmul %55, %9, %cst_24 {dimension_numbers = #tpu.dot_dimension_numbers<[1], [0], [0], [1], [0, 0, 1, 1], [], []>} : vector<8x256xf32>, vector<256x128xf32>, vector<8x128xf32> -> vector<8x128xf32>
    %57 = arith.addf %56, %12 : vector<8x128xf32>
    %58 = math.tanh %57 : vector<8x128xf32>
    %c32 = arith.constant 32 : index
    %c0_25 = arith.constant 0 : index
    %59 = vector.load %arg7[%c32, %c0_25] : memref<64x128xf32, #tpu.memory_space<vmem>>, vector<8x128xf32>
    tpu.vector_store %arg7[%c32, %c0_25], %58 {strides = array<i32>} : memref<64x128xf32, #tpu.memory_space<vmem>>, vector<8x128xf32>,
    %60 = vector.extract_strided_slice %7 {offsets = [40, 0], sizes = [8, 128], strides = [1, 1]} : vector<64x128xf32> to vector<8x128xf32>
    %cst_26 = arith.constant dense<0.000000e+00> : vector<8x128xf32>
    %61 = tpu.matmul %54, %8, %cst_26 {dimension_numbers = #tpu.dot_dimension_numbers<[1], [0], [0], [1], [0, 0, 1, 1], [], []>} : vector<8x128xf32>, vector<128x128xf32>, vector<8x128xf32> -> vector<8x128xf32>
    %62 = arith.addf %60, %61 : vector<8x128xf32>
    %63 = math.tanh %62 : vector<8x128xf32>
    %64 = tpu.concatenate %63, %58 in 1 : vector<8x128xf32>, vector<8x128xf32> -> vector<8x256xf32>
    %cst_27 = arith.constant dense<0.000000e+00> : vector<8x128xf32>
    %65 = tpu.matmul %64, %9, %cst_27 {dimension_numbers = #tpu.dot_dimension_numbers<[1], [0], [0], [1], [0, 0, 1, 1], [], []>} : vector<8x256xf32>, vector<256x128xf32>, vector<8x128xf32> -> vector<8x128xf32>
    %66 = arith.addf %65, %12 : vector<8x128xf32>
    %67 = math.tanh %66 : vector<8x128xf32>
    %c40 = arith.constant 40 : index
    %c0_28 = arith.constant 0 : index
    %68 = vector.load %arg7[%c40, %c0_28] : memref<64x128xf32, #tpu.memory_space<vmem>>, vector<8x128xf32>
    tpu.vector_store %arg7[%c40, %c0_28], %67 {strides = array<i32>} : memref<64x128xf32, #tpu.memory_space<vmem>>, vector<8x128xf32>,
    %69 = vector.extract_strided_slice %7 {offsets = [48, 0], sizes = [8, 128], strides = [1, 1]} : vector<64x128xf32> to vector<8x128xf32>
    %cst_29 = arith.constant dense<0.000000e+00> : vector<8x128xf32>
    %70 = tpu.matmul %63, %8, %cst_29 {dimension_numbers = #tpu.dot_dimension_numbers<[1], [0], [0], [1], [0, 0, 1, 1], [], []>} : vector<8x128xf32>, vector<128x128xf32>, vector<8x128xf32> -> vector<8x128xf32>
    %71 = arith.addf %69, %70 : vector<8x128xf32>
    %72 = math.tanh %71 : vector<8x128xf32>
    %73 = tpu.concatenate %72, %67 in 1 : vector<8x128xf32>, vector<8x128xf32> -> vector<8x256xf32>
    %cst_30 = arith.constant dense<0.000000e+00> : vector<8x128xf32>
    %74 = tpu.matmul %73, %9, %cst_30 {dimension_numbers = #tpu.dot_dimension_numbers<[1], [0], [0], [1], [0, 0, 1, 1], [], []>} : vector<8x256xf32>, vector<256x128xf32>, vector<8x128xf32> -> vector<8x128xf32>
    %75 = arith.addf %74, %12 : vector<8x128xf32>
    %76 = math.tanh %75 : vector<8x128xf32>
    %c48 = arith.constant 48 : index
    %c0_31 = arith.constant 0 : index
    %77 = vector.load %arg7[%c48, %c0_31] : memref<64x128xf32, #tpu.memory_space<vmem>>, vector<8x128xf32>
    tpu.vector_store %arg7[%c48, %c0_31], %76 {strides = array<i32>} : memref<64x128xf32, #tpu.memory_space<vmem>>, vector<8x128xf32>,
    %78 = vector.extract_strided_slice %7 {offsets = [56, 0], sizes = [8, 128], strides = [1, 1]} : vector<64x128xf32> to vector<8x128xf32>
    %cst_32 = arith.constant dense<0.000000e+00> : vector<8x128xf32>
    %79 = tpu.matmul %72, %8, %cst_32 {dimension_numbers = #tpu.dot_dimension_numbers<[1], [0], [0], [1], [0, 0, 1, 1], [], []>} : vector<8x128xf32>, vector<128x128xf32>, vector<8x128xf32> -> vector<8x128xf32>
    %80 = arith.addf %78, %79 : vector<8x128xf32>
    %81 = math.tanh %80 : vector<8x128xf32>
    %82 = tpu.concatenate %81, %76 in 1 : vector<8x128xf32>, vector<8x128xf32> -> vector<8x256xf32>
    %cst_33 = arith.constant dense<0.000000e+00> : vector<8x128xf32>
    %83 = tpu.matmul %82, %9, %cst_33 {dimension_numbers = #tpu.dot_dimension_numbers<[1], [0], [0], [1], [0, 0, 1, 1], [], []>} : vector<8x256xf32>, vector<256x128xf32>, vector<8x128xf32> -> vector<8x128xf32>
    %84 = arith.addf %83, %12 : vector<8x128xf32>
    %85 = math.tanh %84 : vector<8x128xf32>
    %c56 = arith.constant 56 : index
    %c0_34 = arith.constant 0 : index
    %86 = vector.load %arg7[%c56, %c0_34] : memref<64x128xf32, #tpu.memory_space<vmem>>, vector<8x128xf32>
    tpu.vector_store %arg7[%c56, %c0_34], %85 {strides = array<i32>} : memref<64x128xf32, #tpu.memory_space<vmem>>, vector<8x128xf32>,
    %c0_35 = arith.constant 0 : index
    %c0_36 = arith.constant 0 : index
    %87 = vector.load %arg7[%c0_35, %c0_36] : memref<64x128xf32, #tpu.memory_space<vmem>>, vector<64x128xf32>
    %c0_37 = arith.constant 0 : index
    %c0_38 = arith.constant 0 : index
    %88 = vector.load %arg3[%c0_37, %c0_38] : memref<128x128xf32, #tpu.memory_space<vmem>>, vector<128x128xf32>
    %cst_39 = arith.constant dense<0.000000e+00> : vector<64x128xf32>
    %89 = tpu.matmul %87, %88, %cst_39 {dimension_numbers = #tpu.dot_dimension_numbers<[1], [0], [0], [1], [0, 0, 1, 1], [], []>} : vector<64x128xf32>, vector<128x128xf32>, vector<64x128xf32> -> vector<64x128xf32>
    %90 = tpu.iota {dimensions = array<i32: 1>} : vector<64x128xi32>
    %c64_i32 = arith.constant 64 : i32
    %91 = vector.broadcast %c64_i32 : i32 to vector<64x128xi32>
    %92 = arith.cmpi slt, %90, %91 : vector<64x128xi32>
    %cst_40 = arith.constant -1.000000e+30 : f32
    %93 = vector.broadcast %cst_40 : f32 to vector<64x128xf32>
    %94 = arith.select %92, %89, %93 : vector<64x128xi1>, vector<64x128xf32>
    %cst_41 = arith.constant dense<0xFF800000> : vector<64xf32>
    %95 = vector.multi_reduction <maximumf>, %94, %cst_41 [1] : vector<64x128xf32> to vector<64xf32>
    %96 = vector.shape_cast %95 : vector<64xf32> to vector<64x1xf32>
    %97 = vector.broadcast %96 : vector<64x1xf32> to vector<64x128xf32>
    %98 = arith.subf %94, %97 : vector<64x128xf32>
    %99 = math.exp %98 : vector<64x128xf32>
    %cst_42 = arith.constant dense<0.000000e+00> : vector<64xf32>
    %100 = vector.multi_reduction <add>, %99, %cst_42 [1] : vector<64x128xf32> to vector<64xf32>
    %101 = vector.shape_cast %100 : vector<64xf32> to vector<64x1xf32>
    %102 = math.log %101 : vector<64x1xf32>
    %103 = arith.addf %102, %96 : vector<64x1xf32>
    %104 = vector.broadcast %103 : vector<64x1xf32> to vector<64x128xf32>
    %105 = arith.subf %94, %104 : vector<64x128xf32>
    %c0_43 = arith.constant 0 : index
    %c0_44 = arith.constant 0 : index
    %106 = vector.load %arg6[%c0_43, %c0_44] : memref<64x128xf32, #tpu.memory_space<vmem>>, vector<64x128xf32>
    tpu.vector_store %arg6[%c0_43, %c0_44], %105 {strides = array<i32>} : memref<64x128xf32, #tpu.memory_space<vmem>>, vector<64x128xf32>,
    return
  }
  func.func @transform_0(%arg0: i32) -> (i32, i32) {
    %c0_i32 = arith.constant 0 : i32
    %c0_i32_0 = arith.constant 0 : i32
    %c0_i32_1 = arith.constant 0 : i32
    return %c0_i32, %c0_i32_0 : i32, i32
  }
  func.func @transform_1(%arg0: i32) -> (i32, i32) {
    %c0_i32 = arith.constant 0 : i32
    %c0_i32_0 = arith.constant 0 : i32
    %c0_i32_1 = arith.constant 0 : i32
    return %c0_i32, %c0_i32_0 : i32, i32
  }
  func.func @transform_2(%arg0: i32) -> (i32, i32) {
    %c0_i32 = arith.constant 0 : i32
    %c0_i32_0 = arith.constant 0 : i32
    %c0_i32_1 = arith.constant 0 : i32
    return %c0_i32, %c0_i32_0 : i32, i32
  }
  func.func @transform_3(%arg0: i32) -> (i32, i32) {
    %c0_i32 = arith.constant 0 : i32
    %c0_i32_0 = arith.constant 0 : i32
    %c0_i32_1 = arith.constant 0 : i32
    return %c0_i32, %c0_i32_0 : i32, i32
  }
  func.func @transform_4(%arg0: i32) -> (i32, i32) {
    %c0_i32 = arith.constant 0 : i32
    %c0_i32_0 = arith.constant 0 : i32
    %c0_i32_1 = arith.constant 0 : i32
    return %c0_i32, %c0_i32_0 : i32, i32
  }
  func.func @transform_5(%arg0: i32) -> (i32, i32) {
    %c0_i32 = arith.constant 0 : i32
    %c0_i32_0 = arith.constant 0 : i32
    %c0_i32_1 = arith.constant 0 : i32
    return %c0_i32, %c0_i32_0 : i32, i32
  }
}

</mosaic_0001>

<llo_original>
// kernel: rnn_forward.1
$region0: #{rnn_forward.1}
  #allocation0 [shape = 'u32[]', space=smem, size = 0x4, offset = 0x4, fixed_abs, tag = 'smem constant byte address 0x4 - core index']
  #allocation1 [shape = 'u32[72,128]{1,0:T(1,128)}', space=vmem, size = 0x9000, scoped, tag = 'internal scratch']
  #allocation2 [shape = 'f32[64,128]{1,0:T(8,128)}', space=vmem, size = 0x8000, scoped, tag = 'scratch operand']
  %s0 = inlined_call_operand.vmem [shape: s32[64,1], index: 0, kind: input, shape index: {}]
  %s1 = inlined_call_operand.hbm [shape: f32[128,128], index: 1, kind: input, shape index: {}]
  %s2 = inlined_call_operand.hbm [shape: f32[128,128], index: 2, kind: input, shape index: {}]
  %s3 = inlined_call_operand.hbm [shape: f32[384,128], index: 3, kind: input, shape index: {}]
  %s4 = inlined_call_operand.vmem [shape: f32[1,128], index: 4, kind: input, shape index: {}]
  %s5 = inlined_call_operand.vmem [shape: f32[64,128], index: 5, kind: output, shape index: {}]
  %s6 = sld [smem:[#allocation0]]
  $region42: #{rnn_forward.1} parent=0
    _
  %s8 = ssub.s32 1, %s6
  %s9 = scalar_select 0, %s8, %s6
  $region1: #{rnn_forward.1} parent=0
    #allocation3 [shape = 'u8[65536]{0}', space=vmem, size = 0x10000, scoped, tag = 'input window, operand 1, single buffered']
    #allocation4 [shape = 's32[1]{0}', space=sflag, size = 0x4, scoped, tag = 'scoped memory for rnn_forward.1']
    #allocation5 [shape = 'u8[65536]{0}', space=vmem, size = 0x10000, scoped, tag = 'input window, operand 2, single buffered']
    #allocation6 [shape = 's32[1]{0}', space=sflag, size = 0x4, scoped, tag = 'scoped memory for rnn_forward.1']
    #allocation7 [shape = 'u8[196608]{0}', space=vmem, size = 0x30000, scoped, tag = 'input window, operand 3, single buffered']
    %10 = vsyncpa [#allocation4], 0
    %11 = vsyncpa [#allocation6], 0
    // Predicated region
    $region2: #{rnn_forward.1} parent=1 // pred_check
      _
    $region3: #{rnn_forward.1} parent=1 // pred_check_branch
      %13 = sbr.rel (0) target = $region5
    $region4: #{rnn_forward.1} parent=1 // pred_region
      _
    $region5: #{rnn_forward.1} parent=1 // pred_fallthru
      _
    // Predicated region
    $region6: #{rnn_forward.1} parent=1 // pred_check
      _
    $region7: #{rnn_forward.1} parent=1 // pred_check_branch
      %15 = sbr.rel (0) target = $region9
    $region8: #{rnn_forward.1} parent=1 // pred_region
      %17 = vsyncadd [#allocation4], 0
      %s18 = sshll.u32 %s1, 4
      %s19 = int_to_ptr.hbm [resolvable:$true] %s18
      %s20 = sshll.u32 [#allocation3], 4
      %s21 = int_to_ptr.vmem [resolvable:$true] %s20
      %26 = dma.hbm_to_vmem [thread:$0]  %s19, 2048, %s21, [#allocation4], 128, 128, 8
    $region9: #{rnn_forward.1} parent=1 // pred_fallthru
      _
    // Predicated region
    $region10: #{rnn_forward.1} parent=1 // pred_check
      _
    $region11: #{rnn_forward.1} parent=1 // pred_check_branch
      %28 = sbr.rel (0) target = $region13
    $region12: #{rnn_forward.1} parent=1 // pred_region
      %30 = vsyncadd [#allocation6], 0
      %s31 = sshll.u32 %s2, 4
      %s32 = int_to_ptr.hbm [resolvable:$true] %s31
      %s33 = sshll.u32 [#allocation5], 4
      %s34 = int_to_ptr.vmem [resolvable:$true] %s33
      %39 = dma.hbm_to_vmem [thread:$0]  %s32, 2048, %s34, [#allocation6], 128, 128, 8
    $region13: #{rnn_forward.1} parent=1 // pred_fallthru
      _
    // Predicated region
    $region14: #{rnn_forward.1} parent=1 // pred_check
      _
    $region15: #{rnn_forward.1} parent=1 // pred_check_branch
      %41 = sbr.rel (0) target = $region17
    $region16: #{rnn_forward.1} parent=1 // pred_region
      %43 = vsyncadd [#allocation6], 0
      %s44 = sshll.u32 %s3, 4
      %s45 = int_to_ptr.hbm [resolvable:$true] %s44
      %s46 = sshll.u32 [#allocation7], 4
      %s47 = int_to_ptr.vmem [resolvable:$true] %s46
      %52 = dma.hbm_to_vmem [thread:$0]  %s45, 6144, %s47, [#allocation6], 128, 128, 8
    $region17: #{rnn_forward.1} parent=1 // pred_fallthru
      _
    // Predicated region
    $region18: #{rnn_forward.1} parent=1 // pred_check
      _
    $region19: #{rnn_forward.1} parent=1 // pred_check_branch
      %54 = sbr.rel (0) target = $region21
    $region20: #{rnn_forward.1} parent=1 // pred_region
      _
    $region21: #{rnn_forward.1} parent=1 // pred_fallthru
      _
    // Predicated region
    $region22: #{rnn_forward.1} parent=1 // pred_check
      _
    $region23: #{rnn_forward.1} parent=1 // pred_check_branch
      %56 = sbr.rel (0) target = $region25
    $region24: #{rnn_forward.1} parent=1 // pred_region
      %58 = dma.done [#allocation4], 2048
    $region25: #{rnn_forward.1} parent=1 // pred_fallthru
      _
    // Predicated region
    $region26: #{rnn_forward.1} parent=1 // pred_check
      _
    $region27: #{rnn_forward.1} parent=1 // pred_check_branch
      %60 = sbr.rel (0) target = $region29
    $region28: #{rnn_forward.1} parent=1 // pred_region
      %62 = dma.done [#allocation6], 2048
    $region29: #{rnn_forward.1} parent=1 // pred_fallthru
      _
    // Predicated region
    $region30: #{rnn_forward.1} parent=1 // pred_check
      _
    $region31: #{rnn_forward.1} parent=1 // pred_check_branch
      %64 = sbr.rel (0) target = $region33
    $region32: #{rnn_forward.1} parent=1 // pred_region
      %66 = dma.done [#allocation6], 6144
    $region33: #{rnn_forward.1} parent=1 // pred_fallthru
      _
    %v67 = vlaneseq
    %v68 = vand.u32 %v67, 127
    %v69 = vld [vmem:[%s0] sm:$0xff]
    %v70 = vld [vmem:[%s0 + $0x8] sm:$0xff]
    %v71 = vld [vmem:[%s0 + $0x10] sm:$0xff]
    %v72 = vld [vmem:[%s0 + $0x18] sm:$0xff]
    %v73 = vld [vmem:[%s0 + $0x20] sm:$0xff]
    %v74 = vld [vmem:[%s0 + $0x28] sm:$0xff]
    %v75 = vld [vmem:[%s0 + $0x30] sm:$0xff]
    %v76 = vld [vmem:[%s0 + $0x38] sm:$0xff]
    %77 = vset.pattern.permute.xlu0 0
    %78 = vperm.xlu0 %77, %v69
    %v79 = vpop.permute.xlu0 %78
    %80 = vset.pattern.permute.xlu0 0
    %81 = vperm.xlu0 %80, %v70
    %v82 = vpop.permute.xlu0 %81
    %83 = vset.pattern.permute.xlu0 0
    %84 = vperm.xlu0 %83, %v71
    %v85 = vpop.permute.xlu0 %84
    %86 = vset.pattern.permute.xlu0 0
    %87 = vperm.xlu0 %86, %v72
    %v88 = vpop.permute.xlu0 %87
    %89 = vset.pattern.permute.xlu0 0
    %90 = vperm.xlu0 %89, %v73
    %v91 = vpop.permute.xlu0 %90
    %92 = vset.pattern.permute.xlu0 0
    %93 = vperm.xlu0 %92, %v74
    %v94 = vpop.permute.xlu0 %93
    %95 = vset.pattern.permute.xlu0 0
    %96 = vperm.xlu0 %95, %v75
    %v97 = vpop.permute.xlu0 %96
    %98 = vset.pattern.permute.xlu0 0
    %99 = vperm.xlu0 %98, %v76
    %v100 = vpop.permute.xlu0 %99
    %vm101 = vcmp.eq.s32.totalorder %v68, %v79
    %vm102 = vcmp.eq.s32.totalorder %v68, %v82
    %vm103 = vcmp.eq.s32.totalorder %v68, %v85
    %vm104 = vcmp.eq.s32.totalorder %v68, %v88
    %vm105 = vcmp.eq.s32.totalorder %v68, %v91
    %vm106 = vcmp.eq.s32.totalorder %v68, %v94
    %vm107 = vcmp.eq.s32.totalorder %v68, %v97
    %vm108 = vcmp.eq.s32.totalorder %v68, %v100
    %v109 = vsel %vm101, 1, 0
    %v110 = vsel %vm102, 1, 0
    %v111 = vsel %vm103, 1, 0
    %v112 = vsel %vm104, 1, 0
    %v113 = vsel %vm105, 1, 0
    %v114 = vsel %vm106, 1, 0
    %v115 = vsel %vm107, 1, 0
    %v116 = vsel %vm108, 1, 0
    %v117 = vcvt.s32.f32 %v109
    %v118 = vcvt.s32.f32 %v110
    %v119 = vcvt.s32.f32 %v111
    %v120 = vcvt.s32.f32 %v112
    %v121 = vcvt.s32.f32 %v113
    %v122 = vcvt.s32.f32 %v114
    %v123 = vcvt.s32.f32 %v115
    %v124 = vcvt.s32.f32 %v116
    %v125 = vld [vmem:[#allocation3] sm:$0xff]
    %v126 = vld [vmem:[#allocation3 + $0x8] sm:$0xff]
    %v127 = vld [vmem:[#allocation3 + $0x10] sm:$0xff]
    %v128 = vld [vmem:[#allocation3 + $0x18] sm:$0xff]
    %v129 = vld [vmem:[#allocation3 + $0x20] sm:$0xff]
    %v130 = vld [vmem:[#allocation3 + $0x28] sm:$0xff]
    %v131 = vld [vmem:[#allocation3 + $0x30] sm:$0xff]
    %v132 = vld [vmem:[#allocation3 + $0x38] sm:$0xff]
    %v133 = vld [vmem:[#allocation3 + $0x40] sm:$0xff]
    %v134 = vld [vmem:[#allocation3 + $0x48] sm:$0xff]
    %v135 = vld [vmem:[#allocation3 + $0x50] sm:$0xff]
    %v136 = vld [vmem:[#allocation3 + $0x58] sm:$0xff]
    %v137 = vld [vmem:[#allocation3 + $0x60] sm:$0xff]
    %v138 = vld [vmem:[#allocation3 + $0x68] sm:$0xff]
    %v139 = vld [vmem:[#allocation3 + $0x70] sm:$0xff]
    %v140 = vld [vmem:[#allocation3 + $0x78] sm:$0xff]
    %141 = vmatpush.msra.mxu0 %v140
    %142 = vmatpush.msra.mxu0 %v139
    %143 = vmatpush.msra.mxu0 %v138
    %144 = vmatpush.msra.mxu0 %v137
    %145 = vmatpush.msra.mxu0 %v136
    %146 = vmatpush.msra.mxu0 %v135
    %147 = vmatpush.msra.mxu0 %v134
    %148 = vmatpush.msra.mxu0 %v133
    %149 = vmatpush.msra.mxu0 %v132
    %150 = vmatpush.msra.mxu0 %v131
    %151 = vmatpush.msra.mxu0 %v130
    %152 = vmatpush.msra.mxu0 %v129
    %153 = vmatpush.msra.mxu0 %v128
    %154 = vmatpush.msra.mxu0 %v127
    %155 = vmatpush.msra.mxu0 %v126
    %156 = vmatpush.msra.mxu0 %v125
    %157 = vmatmul.f32.gmra.mxu0 %v117
    %v158 = vpop.f32.mrf.mxu0
    %v159 = vadd.f32 0.0, %v158
    %160 = vmatmul.f32.gmra.mxu0 %v118
    %v161 = vpop.f32.mrf.mxu0
    %v162 = vadd.f32 0.0, %v161
    %163 = vmatmul.f32.gmra.mxu0 %v119
    %v164 = vpop.f32.mrf.mxu0
    %v165 = vadd.f32 0.0, %v164
    %166 = vmatmul.f32.gmra.mxu0 %v120
    %v167 = vpop.f32.mrf.mxu0
    %v168 = vadd.f32 0.0, %v167
    %169 = vmatmul.f32.gmra.mxu0 %v121
    %v170 = vpop.f32.mrf.mxu0
    %v171 = vadd.f32 0.0, %v170
    %172 = vmatmul.f32.gmra.mxu0 %v122
    %v173 = vpop.f32.mrf.mxu0
    %v174 = vadd.f32 0.0, %v173
    %175 = vmatmul.f32.gmra.mxu0 %v123
    %v176 = vpop.f32.mrf.mxu0
    %v177 = vadd.f32 0.0, %v176
    %178 = vmatmul.f32.gmra.mxu0 %v124
    %v179 = vpop.f32.mrf.mxu0
    %v180 = vadd.f32 0.0, %v179
    %181 = vdwg.mxu0
    %v182 = vld [vmem:[#allocation7] sm:$0xff]
    %v183 = vld [vmem:[#allocation7 + $0x8] sm:$0xff]
    %v184 = vld [vmem:[#allocation7 + $0x10] sm:$0xff]
    %v185 = vld [vmem:[#allocation7 + $0x18] sm:$0xff]
    %v186 = vld [vmem:[#allocation7 + $0x20] sm:$0xff]
    %v187 = vld [vmem:[#allocation7 + $0x28] sm:$0xff]
    %v188 = vld [vmem:[#allocation7 + $0x30] sm:$0xff]
    %v189 = vld [vmem:[#allocation7 + $0x38] sm:$0xff]
    %v190 = vld [vmem:[#allocation7 + $0x40] sm:$0xff]
    %v191 = vld [vmem:[#allocation7 + $0x48] sm:$0xff]
    %v192 = vld [vmem:[#allocation7 + $0x50] sm:$0xff]
    %v193 = vld [vmem:[#allocation7 + $0x58] sm:$0xff]
    %v194 = vld [vmem:[#allocation7 + $0x60] sm:$0xff]
    %v195 = vld [vmem:[#allocation7 + $0x68] sm:$0xff]
    %v196 = vld [vmem:[#allocation7 + $0x70] sm:$0xff]
    %v197 = vld [vmem:[#allocation7 + $0x78] sm:$0xff]
    %v198 = vld [vmem:[#allocation7 + $0x80] sm:$0xff]
    %v199 = vld [vmem:[#allocation7 + $0x88] sm:$0xff]
    %v200 = vld [vmem:[#allocation7 + $0x90] sm:$0xff]
    %v201 = vld [vmem:[#allocation7 + $0x98] sm:$0xff]
    %v202 = vld [vmem:[#allocation7 + $0xa0] sm:$0xff]
    %v203 = vld [vmem:[#allocation7 + $0xa8] sm:$0xff]
    %v204 = vld [vmem:[#allocation7 + $0xb0] sm:$0xff]
    %v205 = vld [vmem:[#allocation7 + $0xb8] sm:$0xff]
    %v206 = vld [vmem:[#allocation7 + $0xc0] sm:$0xff]
    %v207 = vld [vmem:[#allocation7 + $0xc8] sm:$0xff]
    %v208 = vld [vmem:[#allocation7 + $0xd0] sm:$0xff]
    %v209 = vld [vmem:[#allocation7 + $0xd8] sm:$0xff]
    %v210 = vld [vmem:[#allocation7 + $0xe0] sm:$0xff]
    %v211 = vld [vmem:[#allocation7 + $0xe8] sm:$0xff]
    %v212 = vld [vmem:[#allocation7 + $0xf0] sm:$0xff]
    %v213 = vld [vmem:[#allocation7 + $0xf8] sm:$0xff]
    %v214 = vld [vmem:[#allocation7 + $0x100] sm:$0xff]
    %v215 = vld [vmem:[#allocation7 + $0x108] sm:$0xff]
    %v216 = vld [vmem:[#allocation7 + $0x110] sm:$0xff]
    %v217 = vld [vmem:[#allocation7 + $0x118] sm:$0xff]
    %v218 = vld [vmem:[#allocation7 + $0x120] sm:$0xff]
    %v219 = vld [vmem:[#allocation7 + $0x128] sm:$0xff]
    %v220 = vld [vmem:[#allocation7 + $0x130] sm:$0xff]
    %v221 = vld [vmem:[#allocation7 + $0x138] sm:$0xff]
    %v222 = vld [vmem:[#allocation7 + $0x140] sm:$0xff]
    %v223 = vld [vmem:[#allocation7 + $0x148] sm:$0xff]
    %v224 = vld [vmem:[#allocation7 + $0x150] sm:$0xff]
    %v225 = vld [vmem:[#allocation7 + $0x158] sm:$0xff]
    %v226 = vld [vmem:[#allocation7 + $0x160] sm:$0xff]
    %v227 = vld [vmem:[#allocation7 + $0x168] sm:$0xff]
    %v228 = vld [vmem:[#allocation7 + $0x170] sm:$0xff]
    %v229 = vld [vmem:[#allocation7 + $0x178] sm:$0xff]
    %v230 = vld [vmem:[%s4] sm:$0x1]
    %v232 = vperm.slane %v230, 0
    %234 = vmatpush.msra.mxu0 %v197
    %235 = vmatpush.msra.mxu0 %v196
    %236 = vmatpush.msra.mxu0 %v195
    %237 = vmatpush.msra.mxu0 %v194
    %238 = vmatpush.msra.mxu0 %v193
    %239 = vmatpush.msra.mxu0 %v192
    %240 = vmatpush.msra.mxu0 %v191
    %241 = vmatpush.msra.mxu0 %v190
    %242 = vmatpush.msra.mxu0 %v189
    %243 = vmatpush.msra.mxu0 %v188
    %244 = vmatpush.msra.mxu0 %v187
    %245 = vmatpush.msra.mxu0 %v186
    %246 = vmatpush.msra.mxu0 %v185
    %247 = vmatpush.msra.mxu0 %v184
    %248 = vmatpush.msra.mxu0 %v183
    %249 = vmatpush.msra.mxu0 %v182
    %250 = vmatmul.f32.gmra.mxu0 0.0
    %v251 = vpop.f32.mrf.mxu0
    %v252 = vadd.f32 0.0, %v251
    %253 = vdwg.mxu0
    %v254 = vadd.f32 %v159, %v252
    %v255 = vtanh.pop %v254
    %256 = vmatpush.msra.mxu0 %v213
    %257 = vmatpush.msra.mxu0 %v212
    %258 = vmatpush.msra.mxu0 %v211
    %259 = vmatpush.msra.mxu0 %v210
    %260 = vmatpush.msra.mxu0 %v209
    %261 = vmatpush.msra.mxu0 %v208
    %262 = vmatpush.msra.mxu0 %v207
    %263 = vmatpush.msra.mxu0 %v206
    %264 = vmatpush.msra.mxu0 %v205
    %265 = vmatpush.msra.mxu0 %v204
    %266 = vmatpush.msra.mxu0 %v203
    %267 = vmatpush.msra.mxu0 %v202
    %268 = vmatpush.msra.mxu0 %v201
    %269 = vmatpush.msra.mxu0 %v200
    %270 = vmatpush.msra.mxu0 %v199
    %271 = vmatpush.msra.mxu0 %v198
    %272 = vmatmul.f32.gmra.mxu0 %v255
    %v273 = vpop.f32.mrf.mxu0
    %v274 = vadd.f32 %v232, %v273
    %275 = vdwg.mxu0
    %276 = vmatpush.msra.mxu0 %v229
    %277 = vmatpush.msra.mxu0 %v228
    %278 = vmatpush.msra.mxu0 %v227
    %279 = vmatpush.msra.mxu0 %v226
    %280 = vmatpush.msra.mxu0 %v225
    %281 = vmatpush.msra.mxu0 %v224
    %282 = vmatpush.msra.mxu0 %v223
    %283 = vmatpush.msra.mxu0 %v222
    %284 = vmatpush.msra.mxu0 %v221
    %285 = vmatpush.msra.mxu0 %v220
    %286 = vmatpush.msra.mxu0 %v219
    %287 = vmatpush.msra.mxu0 %v218
    %288 = vmatpush.msra.mxu0 %v217
    %289 = vmatpush.msra.mxu0 %v216
    %290 = vmatpush.msra.mxu0 %v215
    %291 = vmatpush.msra.mxu0 %v214
    %292 = vmatmul.f32.gmra.mxu0 0.0
    %v293 = vpop.f32.mrf.mxu0
    %v294 = vadd.f32 %v274, %v293
    %295 = vdwg.mxu0
    %v296 = vtanh.pop %v294
    %297 = vst [vmem:[#allocation2] sm:$0xff] %v296
    %298 = vmatpush.msra.mxu0 %v197
    %299 = vmatpush.msra.mxu0 %v196
    %300 = vmatpush.msra.mxu0 %v195
    %301 = vmatpush.msra.mxu0 %v194
    %302 = vmatpush.msra.mxu0 %v193
    %303 = vmatpush.msra.mxu0 %v192
    %304 = vmatpush.msra.mxu0 %v191
    %305 = vmatpush.msra.mxu0 %v190
    %306 = vmatpush.msra.mxu0 %v189
    %307 = vmatpush.msra.mxu0 %v188
    %308 = vmatpush.msra.mxu0 %v187
    %309 = vmatpush.msra.mxu0 %v186
    %310 = vmatpush.msra.mxu0 %v185
    %311 = vmatpush.msra.mxu0 %v184
    %312 = vmatpush.msra.mxu0 %v183
    %313 = vmatpush.msra.mxu0 %v182
    %314 = vmatmul.f32.gmra.mxu0 %v255
    %v315 = vpop.f32.mrf.mxu0
    %v316 = vadd.f32 0.0, %v315
    %317 = vdwg.mxu0
    %v318 = vadd.f32 %v162, %v316
    %v319 = vtanh.pop %v318
    %320 = vmatpush.msra.mxu0 %v213
    %321 = vmatpush.msra.mxu0 %v212
    %322 = vmatpush.msra.mxu0 %v211
    %323 = vmatpush.msra.mxu0 %v210
    %324 = vmatpush.msra.mxu0 %v209
    %325 = vmatpush.msra.mxu0 %v208
    %326 = vmatpush.msra.mxu0 %v207
    %327 = vmatpush.msra.mxu0 %v206
    %328 = vmatpush.msra.mxu0 %v205
    %329 = vmatpush.msra.mxu0 %v204
    %330 = vmatpush.msra.mxu0 %v203
    %331 = vmatpush.msra.mxu0 %v202
    %332 = vmatpush.msra.mxu0 %v201
    %333 = vmatpush.msra.mxu0 %v200
    %334 = vmatpush.msra.mxu0 %v199
    %335 = vmatpush.msra.mxu0 %v198
    %336 = vmatmul.f32.gmra.mxu0 %v319
    %v337 = vpop.f32.mrf.mxu0
    %v338 = vadd.f32 %v232, %v337
    %339 = vdwg.mxu0
    %340 = vmatpush.msra.mxu0 %v229
    %341 = vmatpush.msra.mxu0 %v228
    %342 = vmatpush.msra.mxu0 %v227
    %343 = vmatpush.msra.mxu0 %v226
    %344 = vmatpush.msra.mxu0 %v225
    %345 = vmatpush.msra.mxu0 %v224
    %346 = vmatpush.msra.mxu0 %v223
    %347 = vmatpush.msra.mxu0 %v222
    %348 = vmatpush.msra.mxu0 %v221
    %349 = vmatpush.msra.mxu0 %v220
    %350 = vmatpush.msra.mxu0 %v219
    %351 = vmatpush.msra.mxu0 %v218
    %352 = vmatpush.msra.mxu0 %v217
    %353 = vmatpush.msra.mxu0 %v216
    %354 = vmatpush.msra.mxu0 %v215
    %355 = vmatpush.msra.mxu0 %v214
    %356 = vmatmul.f32.gmra.mxu0 %v296
    %v357 = vpop.f32.mrf.mxu0
    %v358 = vadd.f32 %v338, %v357
    %359 = vdwg.mxu0
    %v360 = vtanh.pop %v358
    %361 = vst [vmem:[#allocation2 + $0x8] sm:$0xff] %v360
    %362 = vmatpush.msra.mxu0 %v197
    %363 = vmatpush.msra.mxu0 %v196
    %364 = vmatpush.msra.mxu0 %v195
    %365 = vmatpush.msra.mxu0 %v194
    %366 = vmatpush.msra.mxu0 %v193
    %367 = vmatpush.msra.mxu0 %v192
    %368 = vmatpush.msra.mxu0 %v191
    %369 = vmatpush.msra.mxu0 %v190
    %370 = vmatpush.msra.mxu0 %v189
    %371 = vmatpush.msra.mxu0 %v188
    %372 = vmatpush.msra.mxu0 %v187
    %373 = vmatpush.msra.mxu0 %v186
    %374 = vmatpush.msra.mxu0 %v185
    %375 = vmatpush.msra.mxu0 %v184
    %376 = vmatpush.msra.mxu0 %v183
    %377 = vmatpush.msra.mxu0 %v182
    %378 = vmatmul.f32.gmra.mxu0 %v319
    %v379 = vpop.f32.mrf.mxu0
    %v380 = vadd.f32 0.0, %v379
    %381 = vdwg.mxu0
    %v382 = vadd.f32 %v165, %v380
    %v383 = vtanh.pop %v382
    %384 = vmatpush.msra.mxu0 %v213
    %385 = vmatpush.msra.mxu0 %v212
    %386 = vmatpush.msra.mxu0 %v211
    %387 = vmatpush.msra.mxu0 %v210
    %388 = vmatpush.msra.mxu0 %v209
    %389 = vmatpush.msra.mxu0 %v208
    %390 = vmatpush.msra.mxu0 %v207
    %391 = vmatpush.msra.mxu0 %v206
    %392 = vmatpush.msra.mxu0 %v205
    %393 = vmatpush.msra.mxu0 %v204
    %394 = vmatpush.msra.mxu0 %v203
    %395 = vmatpush.msra.mxu0 %v202
    %396 = vmatpush.msra.mxu0 %v201
    %397 = vmatpush.msra.mxu0 %v200
    %398 = vmatpush.msra.mxu0 %v199
    %399 = vmatpush.msra.mxu0 %v198
    %400 = vmatmul.f32.gmra.mxu0 %v383
    %v401 = vpop.f32.mrf.mxu0
    %v402 = vadd.f32 %v232, %v401
    %403 = vdwg.mxu0
    %404 = vmatpush.msra.mxu0 %v229
    %405 = vmatpush.msra.mxu0 %v228
    %406 = vmatpush.msra.mxu0 %v227
    %407 = vmatpush.msra.mxu0 %v226
    %408 = vmatpush.msra.mxu0 %v225
    %409 = vmatpush.msra.mxu0 %v224
    %410 = vmatpush.msra.mxu0 %v223
    %411 = vmatpush.msra.mxu0 %v222
    %412 = vmatpush.msra.mxu0 %v221
    %413 = vmatpush.msra.mxu0 %v220
    %414 = vmatpush.msra.mxu0 %v219
    %415 = vmatpush.msra.mxu0 %v218
    %416 = vmatpush.msra.mxu0 %v217
    %417 = vmatpush.msra.mxu0 %v216
    %418 = vmatpush.msra.mxu0 %v215
    %419 = vmatpush.msra.mxu0 %v214
    %420 = vmatmul.f32.gmra.mxu0 %v360
    %v421 = vpop.f32.mrf.mxu0
    %v422 = vadd.f32 %v402, %v421
    %423 = vdwg.mxu0
    %v424 = vtanh.pop %v422
    %425 = vst [vmem:[#allocation2 + $0x10] sm:$0xff] %v424
    %426 = vmatpush.msra.mxu0 %v197
    %427 = vmatpush.msra.mxu0 %v196
    %428 = vmatpush.msra.mxu0 %v195
    %429 = vmatpush.msra.mxu0 %v194
    %430 = vmatpush.msra.mxu0 %v193
    %431 = vmatpush.msra.mxu0 %v192
    %432 = vmatpush.msra.mxu0 %v191
    %433 = vmatpush.msra.mxu0 %v190
    %434 = vmatpush.msra.mxu0 %v189
    %435 = vmatpush.msra.mxu0 %v188
    %436 = vmatpush.msra.mxu0 %v187
    %437 = vmatpush.msra.mxu0 %v186
    %438 = vmatpush.msra.mxu0 %v185
    %439 = vmatpush.msra.mxu0 %v184
    %440 = vmatpush.msra.mxu0 %v183
    %441 = vmatpush.msra.mxu0 %v182
    %442 = vmatmul.f32.gmra.mxu0 %v383
    %v443 = vpop.f32.mrf.mxu0
    %v444 = vadd.f32 0.0, %v443
    %445 = vdwg.mxu0
    %v446 = vadd.f32 %v168, %v444
    %v447 = vtanh.pop %v446
    %448 = vmatpush.msra.mxu0 %v213
    %449 = vmatpush.msra.mxu0 %v212
    %450 = vmatpush.msra.mxu0 %v211
    %451 = vmatpush.msra.mxu0 %v210
    %452 = vmatpush.msra.mxu0 %v209
    %453 = vmatpush.msra.mxu0 %v208
    %454 = vmatpush.msra.mxu0 %v207
    %455 = vmatpush.msra.mxu0 %v206
    %456 = vmatpush.msra.mxu0 %v205
    %457 = vmatpush.msra.mxu0 %v204
    %458 = vmatpush.msra.mxu0 %v203
    %459 = vmatpush.msra.mxu0 %v202
    %460 = vmatpush.msra.mxu0 %v201
    %461 = vmatpush.msra.mxu0 %v200
    %462 = vmatpush.msra.mxu0 %v199
    %463 = vmatpush.msra.mxu0 %v198
    %464 = vmatmul.f32.gmra.mxu0 %v447
    %v465 = vpop.f32.mrf.mxu0
    %v466 = vadd.f32 %v232, %v465
    %467 = vdwg.mxu0
    %468 = vmatpush.msra.mxu0 %v229
    %469 = vmatpush.msra.mxu0 %v228
    %470 = vmatpush.msra.mxu0 %v227
    %471 = vmatpush.msra.mxu0 %v226
    %472 = vmatpush.msra.mxu0 %v225
    %473 = vmatpush.msra.mxu0 %v224
    %474 = vmatpush.msra.mxu0 %v223
    %475 = vmatpush.msra.mxu0 %v222
    %476 = vmatpush.msra.mxu0 %v221
    %477 = vmatpush.msra.mxu0 %v220
    %478 = vmatpush.msra.mxu0 %v219
    %479 = vmatpush.msra.mxu0 %v218
    %480 = vmatpush.msra.mxu0 %v217
    %481 = vmatpush.msra.mxu0 %v216
    %482 = vmatpush.msra.mxu0 %v215
    %483 = vmatpush.msra.mxu0 %v214
    %484 = vmatmul.f32.gmra.mxu0 %v424
    %v485 = vpop.f32.mrf.mxu0
    %v486 = vadd.f32 %v466, %v485
    %487 = vdwg.mxu0
    %v488 = vtanh.pop %v486
    %489 = vst [vmem:[#allocation2 + $0x18] sm:$0xff] %v488
    %490 = vmatpush.msra.mxu0 %v197
    %491 = vmatpush.msra.mxu0 %v196
    %492 = vmatpush.msra.mxu0 %v195
    %493 = vmatpush.msra.mxu0 %v194
    %494 = vmatpush.msra.mxu0 %v193
    %495 = vmatpush.msra.mxu0 %v192
    %496 = vmatpush.msra.mxu0 %v191
    %497 = vmatpush.msra.mxu0 %v190
    %498 = vmatpush.msra.mxu0 %v189
    %499 = vmatpush.msra.mxu0 %v188
    %500 = vmatpush.msra.mxu0 %v187
    %501 = vmatpush.msra.mxu0 %v186
    %502 = vmatpush.msra.mxu0 %v185
    %503 = vmatpush.msra.mxu0 %v184
    %504 = vmatpush.msra.mxu0 %v183
    %505 = vmatpush.msra.mxu0 %v182
    %506 = vmatmul.f32.gmra.mxu0 %v447
    %v507 = vpop.f32.mrf.mxu0
    %v508 = vadd.f32 0.0, %v507
    %509 = vdwg.mxu0
    %v510 = vadd.f32 %v171, %v508
    %v511 = vtanh.pop %v510
    %512 = vmatpush.msra.mxu0 %v213
    %513 = vmatpush.msra.mxu0 %v212
    %514 = vmatpush.msra.mxu0 %v211
    %515 = vmatpush.msra.mxu0 %v210
    %516 = vmatpush.msra.mxu0 %v209
    %517 = vmatpush.msra.mxu0 %v208
    %518 = vmatpush.msra.mxu0 %v207
    %519 = vmatpush.msra.mxu0 %v206
    %520 = vmatpush.msra.mxu0 %v205
    %521 = vmatpush.msra.mxu0 %v204
    %522 = vmatpush.msra.mxu0 %v203
    %523 = vmatpush.msra.mxu0 %v202
    %524 = vmatpush.msra.mxu0 %v201
    %525 = vmatpush.msra.mxu0 %v200
    %526 = vmatpush.msra.mxu0 %v199
    %527 = vmatpush.msra.mxu0 %v198
    %528 = vmatmul.f32.gmra.mxu0 %v511
    %v529 = vpop.f32.mrf.mxu0
    %v530 = vadd.f32 %v232, %v529
    %531 = vdwg.mxu0
    %532 = vmatpush.msra.mxu0 %v229
    %533 = vmatpush.msra.mxu0 %v228
    %534 = vmatpush.msra.mxu0 %v227
    %535 = vmatpush.msra.mxu0 %v226
    %536 = vmatpush.msra.mxu0 %v225
    %537 = vmatpush.msra.mxu0 %v224
    %538 = vmatpush.msra.mxu0 %v223
    %539 = vmatpush.msra.mxu0 %v222
    %540 = vmatpush.msra.mxu0 %v221
    %541 = vmatpush.msra.mxu0 %v220
    %542 = vmatpush.msra.mxu0 %v219
    %543 = vmatpush.msra.mxu0 %v218
    %544 = vmatpush.msra.mxu0 %v217
    %545 = vmatpush.msra.mxu0 %v216
    %546 = vmatpush.msra.mxu0 %v215
    %547 = vmatpush.msra.mxu0 %v214
    %548 = vmatmul.f32.gmra.mxu0 %v488
    %v549 = vpop.f32.mrf.mxu0
    %v550 = vadd.f32 %v530, %v549
    %551 = vdwg.mxu0
    %v552 = vtanh.pop %v550
    %553 = vst [vmem:[#allocation2 + $0x20] sm:$0xff] %v552
    %554 = vmatpush.msra.mxu0 %v197
    %555 = vmatpush.msra.mxu0 %v196
    %556 = vmatpush.msra.mxu0 %v195
    %557 = vmatpush.msra.mxu0 %v194
    %558 = vmatpush.msra.mxu0 %v193
    %559 = vmatpush.msra.mxu0 %v192
    %560 = vmatpush.msra.mxu0 %v191
    %561 = vmatpush.msra.mxu0 %v190
    %562 = vmatpush.msra.mxu0 %v189
    %563 = vmatpush.msra.mxu0 %v188
    %564 = vmatpush.msra.mxu0 %v187
    %565 = vmatpush.msra.mxu0 %v186
    %566 = vmatpush.msra.mxu0 %v185
    %567 = vmatpush.msra.mxu0 %v184
    %568 = vmatpush.msra.mxu0 %v183
    %569 = vmatpush.msra.mxu0 %v182
    %570 = vmatmul.f32.gmra.mxu0 %v511
    %v571 = vpop.f32.mrf.mxu0
    %v572 = vadd.f32 0.0, %v571
    %573 = vdwg.mxu0
    %v574 = vadd.f32 %v174, %v572
    %v575 = vtanh.pop %v574
    %576 = vmatpush.msra.mxu0 %v213
    %577 = vmatpush.msra.mxu0 %v212
    %578 = vmatpush.msra.mxu0 %v211
    %579 = vmatpush.msra.mxu0 %v210
    %580 = vmatpush.msra.mxu0 %v209
    %581 = vmatpush.msra.mxu0 %v208
    %582 = vmatpush.msra.mxu0 %v207
    %583 = vmatpush.msra.mxu0 %v206
    %584 = vmatpush.msra.mxu0 %v205
    %585 = vmatpush.msra.mxu0 %v204
    %586 = vmatpush.msra.mxu0 %v203
    %587 = vmatpush.msra.mxu0 %v202
    %588 = vmatpush.msra.mxu0 %v201
    %589 = vmatpush.msra.mxu0 %v200
    %590 = vmatpush.msra.mxu0 %v199
    %591 = vmatpush.msra.mxu0 %v198
    %592 = vmatmul.f32.gmra.mxu0 %v575
    %v593 = vpop.f32.mrf.mxu0
    %v594 = vadd.f32 %v232, %v593
    %595 = vdwg.mxu0
    %596 = vmatpush.msra.mxu0 %v229
    %597 = vmatpush.msra.mxu0 %v228
    %598 = vmatpush.msra.mxu0 %v227
    %599 = vmatpush.msra.mxu0 %v226
    %600 = vmatpush.msra.mxu0 %v225
    %601 = vmatpush.msra.mxu0 %v224
    %602 = vmatpush.msra.mxu0 %v223
    %603 = vmatpush.msra.mxu0 %v222
    %604 = vmatpush.msra.mxu0 %v221
    %605 = vmatpush.msra.mxu0 %v220
    %606 = vmatpush.msra.mxu0 %v219
    %607 = vmatpush.msra.mxu0 %v218
    %608 = vmatpush.msra.mxu0 %v217
    %609 = vmatpush.msra.mxu0 %v216
    %610 = vmatpush.msra.mxu0 %v215
    %611 = vmatpush.msra.mxu0 %v214
    %612 = vmatmul.f32.gmra.mxu0 %v552
    %v613 = vpop.f32.mrf.mxu0
    %v614 = vadd.f32 %v594, %v613
    %615 = vdwg.mxu0
    %v616 = vtanh.pop %v614
    %617 = vst [vmem:[#allocation2 + $0x28] sm:$0xff] %v616
    %618 = vmatpush.msra.mxu0 %v197
    %619 = vmatpush.msra.mxu0 %v196
    %620 = vmatpush.msra.mxu0 %v195
    %621 = vmatpush.msra.mxu0 %v194
    %622 = vmatpush.msra.mxu0 %v193
    %623 = vmatpush.msra.mxu0 %v192
    %624 = vmatpush.msra.mxu0 %v191
    %625 = vmatpush.msra.mxu0 %v190
    %626 = vmatpush.msra.mxu0 %v189
    %627 = vmatpush.msra.mxu0 %v188
    %628 = vmatpush.msra.mxu0 %v187
    %629 = vmatpush.msra.mxu0 %v186
    %630 = vmatpush.msra.mxu0 %v185
    %631 = vmatpush.msra.mxu0 %v184
    %632 = vmatpush.msra.mxu0 %v183
    %633 = vmatpush.msra.mxu0 %v182
    %634 = vmatmul.f32.gmra.mxu0 %v575
    %v635 = vpop.f32.mrf.mxu0
    %v636 = vadd.f32 0.0, %v635
    %637 = vdwg.mxu0
    %v638 = vadd.f32 %v177, %v636
    %v639 = vtanh.pop %v638
    %640 = vmatpush.msra.mxu0 %v213
    %641 = vmatpush.msra.mxu0 %v212
    %642 = vmatpush.msra.mxu0 %v211
    %643 = vmatpush.msra.mxu0 %v210
    %644 = vmatpush.msra.mxu0 %v209
    %645 = vmatpush.msra.mxu0 %v208
    %646 = vmatpush.msra.mxu0 %v207
    %647 = vmatpush.msra.mxu0 %v206
    %648 = vmatpush.msra.mxu0 %v205
    %649 = vmatpush.msra.mxu0 %v204
    %650 = vmatpush.msra.mxu0 %v203
    %651 = vmatpush.msra.mxu0 %v202
    %652 = vmatpush.msra.mxu0 %v201
    %653 = vmatpush.msra.mxu0 %v200
    %654 = vmatpush.msra.mxu0 %v199
    %655 = vmatpush.msra.mxu0 %v198
    %656 = vmatmul.f32.gmra.mxu0 %v639
    %v657 = vpop.f32.mrf.mxu0
    %v658 = vadd.f32 %v232, %v657
    %659 = vdwg.mxu0
    %660 = vmatpush.msra.mxu0 %v229
    %661 = vmatpush.msra.mxu0 %v228
    %662 = vmatpush.msra.mxu0 %v227
    %663 = vmatpush.msra.mxu0 %v226
    %664 = vmatpush.msra.mxu0 %v225
    %665 = vmatpush.msra.mxu0 %v224
    %666 = vmatpush.msra.mxu0 %v223
    %667 = vmatpush.msra.mxu0 %v222
    %668 = vmatpush.msra.mxu0 %v221
    %669 = vmatpush.msra.mxu0 %v220
    %670 = vmatpush.msra.mxu0 %v219
    %671 = vmatpush.msra.mxu0 %v218
    %672 = vmatpush.msra.mxu0 %v217
    %673 = vmatpush.msra.mxu0 %v216
    %674 = vmatpush.msra.mxu0 %v215
    %675 = vmatpush.msra.mxu0 %v214
    %676 = vmatmul.f32.gmra.mxu0 %v616
    %v677 = vpop.f32.mrf.mxu0
    %v678 = vadd.f32 %v658, %v677
    %679 = vdwg.mxu0
    %v680 = vtanh.pop %v678
    %681 = vst [vmem:[#allocation2 + $0x30] sm:$0xff] %v680
    %682 = vmatpush.msra.mxu0 %v197
    %683 = vmatpush.msra.mxu0 %v196
    %684 = vmatpush.msra.mxu0 %v195
    %685 = vmatpush.msra.mxu0 %v194
    %686 = vmatpush.msra.mxu0 %v193
    %687 = vmatpush.msra.mxu0 %v192
    %688 = vmatpush.msra.mxu0 %v191
    %689 = vmatpush.msra.mxu0 %v190
    %690 = vmatpush.msra.mxu0 %v189
    %691 = vmatpush.msra.mxu0 %v188
    %692 = vmatpush.msra.mxu0 %v187
    %693 = vmatpush.msra.mxu0 %v186
    %694 = vmatpush.msra.mxu0 %v185
    %695 = vmatpush.msra.mxu0 %v184
    %696 = vmatpush.msra.mxu0 %v183
    %697 = vmatpush.msra.mxu0 %v182
    %698 = vmatmul.f32.gmra.mxu0 %v639
    %v699 = vpop.f32.mrf.mxu0
    %v700 = vadd.f32 0.0, %v699
    %701 = vdwg.mxu0
    %v702 = vadd.f32 %v180, %v700
    %v703 = vtanh.pop %v702
    %704 = vmatpush.msra.mxu0 %v213
    %705 = vmatpush.msra.mxu0 %v212
    %706 = vmatpush.msra.mxu0 %v211
    %707 = vmatpush.msra.mxu0 %v210
    %708 = vmatpush.msra.mxu0 %v209
    %709 = vmatpush.msra.mxu0 %v208
    %710 = vmatpush.msra.mxu0 %v207
    %711 = vmatpush.msra.mxu0 %v206
    %712 = vmatpush.msra.mxu0 %v205
    %713 = vmatpush.msra.mxu0 %v204
    %714 = vmatpush.msra.mxu0 %v203
    %715 = vmatpush.msra.mxu0 %v202
    %716 = vmatpush.msra.mxu0 %v201
    %717 = vmatpush.msra.mxu0 %v200
    %718 = vmatpush.msra.mxu0 %v199
    %719 = vmatpush.msra.mxu0 %v198
    %720 = vmatmul.f32.gmra.mxu0 %v703
    %v721 = vpop.f32.mrf.mxu0
    %v722 = vadd.f32 %v232, %v721
    %723 = vdwg.mxu0
    %724 = vmatpush.msra.mxu0 %v229
    %725 = vmatpush.msra.mxu0 %v228
    %726 = vmatpush.msra.mxu0 %v227
    %727 = vmatpush.msra.mxu0 %v226
    %728 = vmatpush.msra.mxu0 %v225
    %729 = vmatpush.msra.mxu0 %v224
    %730 = vmatpush.msra.mxu0 %v223
    %731 = vmatpush.msra.mxu0 %v222
    %732 = vmatpush.msra.mxu0 %v221
    %733 = vmatpush.msra.mxu0 %v220
    %734 = vmatpush.msra.mxu0 %v219
    %735 = vmatpush.msra.mxu0 %v218
    %736 = vmatpush.msra.mxu0 %v217
    %737 = vmatpush.msra.mxu0 %v216
    %738 = vmatpush.msra.mxu0 %v215
    %739 = vmatpush.msra.mxu0 %v214
    %740 = vmatmul.f32.gmra.mxu0 %v680
    %v741 = vpop.f32.mrf.mxu0
    %v742 = vadd.f32 %v722, %v741
    %743 = vdwg.mxu0
    %v744 = vtanh.pop %v742
    %745 = vst [vmem:[#allocation2 + $0x38] sm:$0xff] %v744
    %v746 = vld [vmem:[#allocation2] sm:$0xff]
    %v747 = vld [vmem:[#allocation2 + $0x8] sm:$0xff]
    %v748 = vld [vmem:[#allocation2 + $0x10] sm:$0xff]
    %v749 = vld [vmem:[#allocation2 + $0x18] sm:$0xff]
    %v750 = vld [vmem:[#allocation2 + $0x20] sm:$0xff]
    %v751 = vld [vmem:[#allocation2 + $0x28] sm:$0xff]
    %v752 = vld [vmem:[#allocation2 + $0x30] sm:$0xff]
    %v753 = vld [vmem:[#allocation2 + $0x38] sm:$0xff]
    %v754 = vld [vmem:[#allocation5] sm:$0xff]
    %v755 = vld [vmem:[#allocation5 + $0x8] sm:$0xff]
    %v756 = vld [vmem:[#allocation5 + $0x10] sm:$0xff]
    %v757 = vld [vmem:[#allocation5 + $0x18] sm:$0xff]
    %v758 = vld [vmem:[#allocation5 + $0x20] sm:$0xff]
    %v759 = vld [vmem:[#allocation5 + $0x28] sm:$0xff]
    %v760 = vld [vmem:[#allocation5 + $0x30] sm:$0xff]
    %v761 = vld [vmem:[#allocation5 + $0x38] sm:$0xff]
    %v762 = vld [vmem:[#allocation5 + $0x40] sm:$0xff]
    %v763 = vld [vmem:[#allocation5 + $0x48] sm:$0xff]
    %v764 = vld [vmem:[#allocation5 + $0x50] sm:$0xff]
    %v765 = vld [vmem:[#allocation5 + $0x58] sm:$0xff]
    %v766 = vld [vmem:[#allocation5 + $0x60] sm:$0xff]
    %v767 = vld [vmem:[#allocation5 + $0x68] sm:$0xff]
    %v768 = vld [vmem:[#allocation5 + $0x70] sm:$0xff]
    %v769 = vld [vmem:[#allocation5 + $0x78] sm:$0xff]
    %770 = vmatpush.msra.mxu0 %v769
    %771 = vmatpush.msra.mxu0 %v768
    %772 = vmatpush.msra.mxu0 %v767
    %773 = vmatpush.msra.mxu0 %v766
    %774 = vmatpush.msra.mxu0 %v765
    %775 = vmatpush.msra.mxu0 %v764
    %776 = vmatpush.msra.mxu0 %v763
    %777 = vmatpush.msra.mxu0 %v762
    %778 = vmatpush.msra.mxu0 %v761
    %779 = vmatpush.msra.mxu0 %v760
    %780 = vmatpush.msra.mxu0 %v759
    %781 = vmatpush.msra.mxu0 %v758
    %782 = vmatpush.msra.mxu0 %v757
    %783 = vmatpush.msra.mxu0 %v756
    %784 = vmatpush.msra.mxu0 %v755
    %785 = vmatpush.msra.mxu0 %v754
    %786 = vmatmul.f32.gmra.mxu0 %v746
    %v787 = vpop.f32.mrf.mxu0
    %v788 = vadd.f32 0.0, %v787
    %789 = vmatmul.f32.gmra.mxu0 %v747
    %v790 = vpop.f32.mrf.mxu0
    %v791 = vadd.f32 0.0, %v790
    %792 = vmatmul.f32.gmra.mxu0 %v748
    %v793 = vpop.f32.mrf.mxu0
    %v794 = vadd.f32 0.0, %v793
    %795 = vmatmul.f32.gmra.mxu0 %v749
    %v796 = vpop.f32.mrf.mxu0
    %v797 = vadd.f32 0.0, %v796
    %798 = vmatmul.f32.gmra.mxu0 %v750
    %v799 = vpop.f32.mrf.mxu0
    %v800 = vadd.f32 0.0, %v799
    %801 = vmatmul.f32.gmra.mxu0 %v751
    %v802 = vpop.f32.mrf.mxu0
    %v803 = vadd.f32 0.0, %v802
    %804 = vmatmul.f32.gmra.mxu0 %v752
    %v805 = vpop.f32.mrf.mxu0
    %v806 = vadd.f32 0.0, %v805
    %807 = vmatmul.f32.gmra.mxu0 %v753
    %v808 = vpop.f32.mrf.mxu0
    %v809 = vadd.f32 0.0, %v808
    %810 = vdwg.mxu0
    %vm811 = vcmp.lt.s32.totalorder %v68, 64
    %v812 = vsel %vm811, %v788, -1e+30
    %v813 = vsel %vm811, %v791, -1e+30
    %v814 = vsel %vm811, %v794, -1e+30
    %v815 = vsel %vm811, %v797, -1e+30
    %v816 = vsel %vm811, %v800, -1e+30
    %v817 = vsel %vm811, %v803, -1e+30
    %v818 = vsel %vm811, %v806, -1e+30
    %v819 = vsel %vm811, %v809, -1e+30
    %820 = vmax.xlane.f32.xlu0 %v812
    %v821 = vpop.xlane.xlu0 %820
    %822 = vmax.xlane.f32.xlu0 %v813
    %v823 = vpop.xlane.xlu0 %822
    %824 = vmax.xlane.f32.xlu0 %v814
    %v825 = vpop.xlane.xlu0 %824
    %826 = vmax.xlane.f32.xlu0 %v815
    %v827 = vpop.xlane.xlu0 %826
    %828 = vmax.xlane.f32.xlu0 %v816
    %v829 = vpop.xlane.xlu0 %828
    %830 = vmax.xlane.f32.xlu0 %v817
    %v831 = vpop.xlane.xlu0 %830
    %832 = vmax.xlane.f32.xlu0 %v818
    %v833 = vpop.xlane.xlu0 %832
    %834 = vmax.xlane.f32.xlu0 %v819
    %v835 = vpop.xlane.xlu0 %834
    %v836 = vsub.f32 %v812, %v821
    %v837 = vsub.f32 %v813, %v823
    %v838 = vsub.f32 %v814, %v825
    %v839 = vsub.f32 %v815, %v827
    %v840 = vsub.f32 %v816, %v829
    %v841 = vsub.f32 %v817, %v831
    %v842 = vsub.f32 %v818, %v833
    %v843 = vsub.f32 %v819, %v835
    %v844 = vmul.f32 %v836, 1.442695
    %v845 = vpow.pop %v844
    %v846 = vmul.f32 %v837, 1.442695
    %v847 = vpow.pop %v846
    %v848 = vmul.f32 %v838, 1.442695
    %v849 = vpow.pop %v848
    %v850 = vmul.f32 %v839, 1.442695
    %v851 = vpow.pop %v850
    %v852 = vmul.f32 %v840, 1.442695
    %v853 = vpow.pop %v852
    %v854 = vmul.f32 %v841, 1.442695
    %v855 = vpow.pop %v854
    %v856 = vmul.f32 %v842, 1.442695
    %v857 = vpow.pop %v856
    %v858 = vmul.f32 %v843, 1.442695
    %v859 = vpow.pop %v858
    %860 = vadd.xlane.f32.xlu0 %v845
    %v861 = vpop.xlane.xlu0 %860
    %862 = vadd.xlane.f32.xlu0 %v847
    %v863 = vpop.xlane.xlu0 %862
    %864 = vadd.xlane.f32.xlu0 %v849
    %v865 = vpop.xlane.xlu0 %864
    %866 = vadd.xlane.f32.xlu0 %v851
    %v867 = vpop.xlane.xlu0 %866
    %868 = vadd.xlane.f32.xlu0 %v853
    %v869 = vpop.xlane.xlu0 %868
    %870 = vadd.xlane.f32.xlu0 %v855
    %v871 = vpop.xlane.xlu0 %870
    %872 = vadd.xlane.f32.xlu0 %v857
    %v873 = vpop.xlane.xlu0 %872
    %874 = vadd.xlane.f32.xlu0 %v859
    %v875 = vpop.xlane.xlu0 %874
    %v876 = vlog2.pop %v861
    %v877 = vmul.f32 %v876, 0.6931472
    %v878 = vlog2.pop %v863
    %v879 = vmul.f32 %v878, 0.6931472
    %v880 = vlog2.pop %v865
    %v881 = vmul.f32 %v880, 0.6931472
    %v882 = vlog2.pop %v867
    %v883 = vmul.f32 %v882, 0.6931472
    %v884 = vlog2.pop %v869
    %v885 = vmul.f32 %v884, 0.6931472
    %v886 = vlog2.pop %v871
    %v887 = vmul.f32 %v886, 0.6931472
    %v888 = vlog2.pop %v873
    %v889 = vmul.f32 %v888, 0.6931472
    %v890 = vlog2.pop %v875
    %v891 = vmul.f32 %v890, 0.6931472
    %v892 = vadd.f32 %v877, %v821
    %v893 = vadd.f32 %v879, %v823
    %v894 = vadd.f32 %v881, %v825
    %v895 = vadd.f32 %v883, %v827
    %v896 = vadd.f32 %v885, %v829
    %v897 = vadd.f32 %v887, %v831
    %v898 = vadd.f32 %v889, %v833
    %v899 = vadd.f32 %v891, %v835
    %v900 = vsub.f32 %v812, %v892
    %v901 = vsub.f32 %v813, %v893
    %v902 = vsub.f32 %v814, %v894
    %v903 = vsub.f32 %v815, %v895
    %v904 = vsub.f32 %v816, %v896
    %v905 = vsub.f32 %v817, %v897
    %v906 = vsub.f32 %v818, %v898
    %v907 = vsub.f32 %v819, %v899
    %908 = vst [vmem:[%s5] sm:$0xff] %v900
    %909 = vst [vmem:[%s5 + $0x8] sm:$0xff] %v901
    %910 = vst [vmem:[%s5 + $0x10] sm:$0xff] %v902
    %911 = vst [vmem:[%s5 + $0x18] sm:$0xff] %v903
    %912 = vst [vmem:[%s5 + $0x20] sm:$0xff] %v904
    %913 = vst [vmem:[%s5 + $0x28] sm:$0xff] %v905
    %914 = vst [vmem:[%s5 + $0x30] sm:$0xff] %v906
    %915 = vst [vmem:[%s5 + $0x38] sm:$0xff] %v907
    // Predicated region
    $region34: #{rnn_forward.1} parent=1 // pred_check
      _
    $region35: #{rnn_forward.1} parent=1 // pred_check_branch
      %917 = sbr.rel (0) target = $region37
    $region36: #{rnn_forward.1} parent=1 // pred_region
      _
    $region37: #{rnn_forward.1} parent=1 // pred_fallthru
      _
    // Predicated region
    $region38: #{rnn_forward.1} parent=1 // pred_check
      _
    $region39: #{rnn_forward.1} parent=1 // pred_check_branch
      %919 = sbr.rel (0) target = $region41
    $region40: #{rnn_forward.1} parent=1 // pred_region
      _
    $region41: #{rnn_forward.1} parent=1 // pred_fallthru
      _
    %920 = vsyncpa [#allocation4], 1
    %921 = vsyncpa [#allocation6], 1

</llo_original>
